<compile_context>
chip_gen: v7x
topology: tpu7x:2x2x1
jax: 0.10.0
libtpu: 0.0.40
codegen_flags: <defaults>
</compile_context>

<pallas_src>
import functools
import math

import jax
import jax.numpy as jnp
from jax.experimental import pallas as pl
from jax.experimental.pallas import tpu as pltpu

_LANE = 128
_SUBLANE = 8


def _round_up(x, m):
    return ((x + m - 1) // m) * m


# --------------------------------------------------------------------------- #
# Kernel
# --------------------------------------------------------------------------- #
def _dsw_prenorm_kernel(x_ref, w_ref, add_ref, gamma_ref, beta_ref, o_ref, *, nl):
    # x_ref:     (rows, seg_len)   segment rows (ordered batch, node, segment)
    # w_ref:     (seg_len, d_model)           resident, single-buffered
    # add_ref:   (nl, d_model)  bias+pos+node, resident, single-buffered
    # gamma/beta:(1, d_model)                  LayerNorm affine
    # o_ref:     (rows, d_model)
    rows, d = o_ref.shape
    y = jnp.dot(x_ref[...], w_ref[...], preferred_element_type=jnp.float32)

    if rows % nl == 0:
        reps = rows // nl
        if reps == 1:
            y = y + add_ref[...]
        else:
            # Sublane-only regroup: broadcast the (nl, d) add table over whole
            # batches inside the block (no bb-tiled HBM table needed).
            y = (y.reshape(reps, nl, d) + add_ref[...][None, :, :]).reshape(rows, d)
    else:
        # nl % rows == 0: this block covers a contiguous slice of the add table.
        start = (pl.program_id(0) * rows) % nl
        start = pl.multiple_of(start, _SUBLANE)
        y = y + add_ref[pl.ds(start, rows), :]

    # Single-pass LayerNorm statistics: var = E[y^2] - mean^2 (one XLU reduction
    # pass less; rsqrt goes to the otherwise-idle EUP slot).
    mean = jnp.mean(y, axis=-1, keepdims=True)
    mean_sq = jnp.mean(y * y, axis=-1, keepdims=True)
    var = mean_sq - mean * mean
    y_hat = (y - mean) * jax.lax.rsqrt(var + 1e-5)
    o_ref[...] = (y_hat * gamma_ref[...] + beta_ref[...]).astype(o_ref.dtype)


# --------------------------------------------------------------------------- #
# Sizing helpers (chip-aware)
# --------------------------------------------------------------------------- #
def _tpu_generation():
    """Best-effort (physical VMEM bytes per TensorCore, TensorCores per chip)."""
    kind = ""
    try:
        kind = jax.devices()[0].device_kind.lower()
    except Exception:
        pass
    if "v7" in kind:
        return 64 << 20, 2            # v7x: 64 MiB / TC, 2 TCs per chip
    if "v4" in kind or "v5p" in kind:
        return 128 << 20, 2           # megacore generations
    return 128 << 20, 1               # v5e / v6e / unknown: single TC, 128 MiB


def _vmem_budgets(phys_vmem):
    """(block-sizing budget, vmem_limit_bytes) per generation."""
    if phys_vmem <= (64 << 20):       # v7x
        return 28 << 20, 48 << 20
    return 64 << 20, 100 << 20        # v5e / v6e


def _vmem_block_bytes(rows, seg_len, d_model, nl, x_bytes, out_bytes):
    """Corrected VMEM estimate: last dims lane-pad to 128; x/out double-buffered,
    constant-index operands single-buffered (pl.Buffered(1))."""
    lane_x = _round_up(seg_len, _LANE)
    lane_d = _round_up(d_model, _LANE)
    x_buf = _round_up(rows, _SUBLANE) * lane_x * x_bytes
    o_buf = _round_up(rows, _SUBLANE) * lane_d * out_bytes
    add_t = _round_up(nl, _SUBLANE) * lane_d * 4
    w_t = _round_up(seg_len, _SUBLANE) * lane_d * x_bytes
    aff = 2 * _SUBLANE * lane_d * 4
    return 2 * (x_buf + o_buf) + add_t + w_t + aff


def _choose_rows_per_block(B, NL, seg_len, d_model, x_bytes, out_bytes,
                           vmem_budget, num_cores, target_rows=8192):
    """Pick segment rows per grid step: as large as the VMEM budget allows
    (amortizes the ~0.35us per-step cost), multiple of NL (whole batches) when
    possible, otherwise an NL-divisor slice."""
    total = B * NL

    def fits(r):
        return _vmem_block_bytes(r, seg_len, d_model, NL, x_bytes,
                                 out_bytes) <= vmem_budget

    whole = [m * NL for m in range(1, B + 1) if B % m == 0]
    ok = [r for r in whole
          if (r % _SUBLANE == 0 or r == total) and fits(r)
          and r <= max(target_rows, NL)]
    if ok:
        rows = max(ok)
    else:
        sub = sorted({NL // k for k in range(1, NL + 1) if NL % k == 0})
        ok = [r for r in sub if r % _SUBLANE == 0 and fits(r)]
        rows = max(ok) if ok else NL

    # Only on 2-TensorCore chips (v7x): make sure the parallel grid has >= 2
    # steps, provided blocks stay >= 128 rows (bandwidth-efficient).
    if num_cores >= 2 and total // rows < 2:
        half = rows // 2
        if (half >= 128 and half % _SUBLANE == 0 and total % half == 0
                and (half % NL == 0 or NL % half == 0)):
            rows = half
    return rows


def _resident_spec(block_shape):
    """Constant-index operand: request a single buffer (no double-buffer waste)."""
    try:
        return pl.BlockSpec(block_shape, lambda i: (0, 0),
                            pipeline_mode=pl.Buffered(1))
    except Exception:  # older jax without pipeline_mode/Buffered -> default 2-buf
        return pl.BlockSpec(block_shape, lambda i: (0, 0))


# --------------------------------------------------------------------------- #
# Forward wrapper
# --------------------------------------------------------------------------- #
def dygraphformer_forward(x_seq, params, *, seg_len, in_len, data_dim, d_model,
                          baseline=False, input_dtype=jnp.float32,
                          out_dtype=jnp.float32):
    """x_seq: (B, T, N) float32. Returns (B, N, L, d_model) of `out_dtype`."""
    B, T, N = x_seq.shape
    assert T == in_len and N == data_dim

    pad_in_len = math.ceil(in_len / seg_len) * seg_len
    in_len_add = pad_in_len - in_len
    L = pad_in_len // seg_len
    NL = N * L

    if baseline:
        _base = jnp.mean(x_seq, axis=1, keepdims=True)  # computed but unused (as in ref)

    # Pad front by repeating the first timestep (same as torch.cat/expand).
    if in_len_add != 0:
        front = jnp.broadcast_to(x_seq[:, :1, :], (B, in_len_add, N))
        x_seq = jnp.concatenate([front, x_seq], axis=1)       # (B, pad_in_len, N)

    # DSW segment layout 'b (l s) n -> ((b n) l) s'. Standalone XLA transpose
    # (x stream is ~1/16 of total traffic; a fused strided gather is not worth it).
    x2d = jnp.transpose(x_seq, (0, 2, 1)).reshape(B * NL, seg_len).astype(input_dtype)
    w = params["w"].astype(input_dtype)

    phys_vmem, num_cores = _tpu_generation()
    vmem_budget, vmem_limit = _vmem_budgets(phys_vmem)
    rows = _choose_rows_per_block(
        B, NL, seg_len, d_model,
        jnp.dtype(input_dtype).itemsize, jnp.dtype(out_dtype).itemsize,
        vmem_budget, num_cores)
    assert (B * NL) % rows == 0 and (rows % NL == 0 or NL % rows == 0)
    grid = ((B * NL) // rows,)

    # Fold bias + positional + node embeddings into ONE small (N*L, d_model)
    # table; rows inside a block are ordered (batch, node, segment), so the
    # kernel broadcasts this table — no (rows, d_model) HBM materialization.
    add_nl = (params["b"][None, :, :]            # (1, 1, D)
              + params["pos_emb"][None, :, :]    # (1, L, D)
              + params["node_emb"][:, None, :]   # (N, 1, D)
              ).reshape(NL, d_model).astype(jnp.float32)

    out2d = pl.pallas_call(
        functools.partial(_dsw_prenorm_kernel, nl=NL),
        out_shape=jax.ShapeDtypeStruct((B * NL, d_model), out_dtype),
        grid=grid,
        in_specs=[
            pl.BlockSpec((rows, seg_len), lambda i: (i, 0)),   # x segments (pipelined)
            _resident_spec((seg_len, d_model)),                # W (resident)
            _resident_spec((NL, d_model)),                     # add table (resident)
            _resident_spec((1, d_model)),                      # LN gamma
            _resident_spec((1, d_model)),                      # LN beta
        ],
        out_specs=pl.BlockSpec((rows, d_model), lambda i: (i, 0)),
        compiler_params=pltpu.CompilerParams(
            dimension_semantics=("parallel",),
            vmem_limit_bytes=vmem_limit,
        ),
    )(x2d, w, add_nl, params["ln_gamma"], params["ln_beta"])

    enc_in = out2d.reshape(B, N, L, d_model)
    # TODO(synk): self.encoder(...) not implementable (source not in reference module)
    return enc_in


# --------------------------------------------------------------------------- #
# Pure-JAX reference + params
# --------------------------------------------------------------------------- #
def _reference_forward(x_seq, params, *, seg_len, in_len, data_dim, d_model):
    B, T, N = x_seq.shape
    pad_in_len = math.ceil(in_len / seg_len) * seg_len
    in_len_add = pad_in_len - in_len
    L = pad_in_len // seg_len
    if in_len_add != 0:
        front = jnp.broadcast_to(x_seq[:, :1, :], (B, in_len_add, N))
        x_seq = jnp.concatenate([front, x_seq], axis=1)
    x_seg = jnp.transpose(x_seq, (0, 2, 1)).reshape(B, N, L, seg_len)
    y = jnp.einsum("bnls,sd->bnld", x_seg, params["w"]) + params["b"][0]
    y = y + params["pos_emb"][None, None, :, :]
    y = y + params["node_emb"][None, :, None, :]
    mean = jnp.mean(y, axis=-1, keepdims=True)
    var = jnp.mean((y - mean) ** 2, axis=-1, keepdims=True)
    y = (y - mean) * jax.lax.rsqrt(var + 1e-5)
    return y * params["ln_gamma"][0] + params["ln_beta"][0]


def make_params(key, *, seg_len, d_model, data_dim, L):
    k_w, k_b, k_pos, k_node = jax.random.split(key, 4)
    bound = 1.0 / math.sqrt(seg_len)  # nn.Linear default init range
    return {
        # nn.Linear(seg_len, d_model): stored transposed so kernel does x @ W
        "w": jax.random.uniform(k_w, (seg_len, d_model), jnp.float32, -bound, bound),
        "b": jax.random.uniform(k_b, (1, d_model), jnp.float32, -bound, bound),
        # nn.Parameter(torch.randn(1, 1, L, d_model)) -> (L, d_model)
        "pos_emb": jax.random.normal(k_pos, (L, d_model), jnp.float32),
        # nn.Parameter(torch.randn(1, data_dim, 1, d_model)) -> (data_dim, d_model)
        "node_emb": jax.random.normal(k_node, (data_dim, d_model), jnp.float32),
        # nn.LayerNorm(d_model) default init
        "ln_gamma": jnp.ones((1, d_model), jnp.float32),
        "ln_beta": jnp.zeros((1, d_model), jnp.float32),
    }


if __name__ == "__main__":
    # Small, module-consistent shapes.
    B = 2          # batch
    data_dim = 4   # N (number of series / graph nodes)
    in_len = 12    # T (forces the in_len_add = 4 padding path)
    seg_len = 8
    d_model = 32
    pad_in_len = math.ceil(in_len / seg_len) * seg_len
    L = pad_in_len // seg_len

    key = jax.random.PRNGKey(0)
    k_x, k_p = jax.random.split(key)
    x_seq = jax.random.normal(k_x, (B, in_len, data_dim), jnp.float32)
    params = make_params(k_p, seg_len=seg_len, d_model=d_model,
                         data_dim=data_dim, L=L)

    ref = _reference_forward(x_seq, params, seg_len=seg_len, in_len=in_len,
                             data_dim=data_dim, d_model=d_model)

    # f32 output path (strict check).
    fwd_f32 = jax.jit(functools.partial(
        dygraphformer_forward, seg_len=seg_len, in_len=in_len,
        data_dim=data_dim, d_model=d_model, baseline=False,
        input_dtype=jnp.float32, out_dtype=jnp.float32))
    out = jax.block_until_ready(fwd_f32(x_seq, params))
    assert out.shape == (B, data_dim, L, d_model)
    assert jnp.allclose(out, ref, atol=1e-4, rtol=1e-4)

    # bf16 OUTPUT path (the output stream dominates HBM traffic ~16x over the
    # input); accumulation + LayerNorm stay f32 inside the kernel.
    fwd_bf16out = jax.jit(functools.partial(
        dygraphformer_forward, seg_len=seg_len, in_len=in_len,
        data_dim=data_dim, d_model=d_model, baseline=False,
        input_dtype=jnp.float32, out_dtype=jnp.bfloat16))
    out_bf16 = jax.block_until_ready(fwd_bf16out(x_seq, params))
    assert out_bf16.shape == (B, data_dim, L, d_model)
    assert out_bf16.dtype == jnp.bfloat16
    assert jnp.allclose(out_bf16.astype(jnp.float32), ref, atol=5e-2, rtol=5e-2)

    print("KERNEL_OK")
</pallas_src>

<mosaic_0001>
module attributes {stable_mosaic.version = 11 : i64} {
  func.func @_dsw_prenorm_kernel(%arg0: i32, %arg1: memref<16x8xf32, #tpu.memory_space<vmem>>, %arg2: memref<8x32xf32, #tpu.memory_space<vmem>>, %arg3: memref<8x32xf32, #tpu.memory_space<vmem>>, %arg4: memref<1x32xf32, #tpu.memory_space<vmem>>, %arg5: memref<1x32xf32, #tpu.memory_space<vmem>>, %arg6: memref<16x32xf32, #tpu.memory_space<vmem>>) attributes {dimension_semantics = [#tpu.dimension_semantics<parallel>], iteration_bounds = array<i64: 1>, scalar_prefetch = 0 : i64, scratch_operands = 0 : i64, tpu.core_type = #tpu.core_type<tc>, window_params = [{transform_indices = @transform_0, window_bounds = array<i64: 16, 8>}, {pipeline_mode = #tpu.pipeline_mode<synchronous>, transform_indices = @transform_1, window_bounds = array<i64: 8, 32>}, {pipeline_mode = #tpu.pipeline_mode<synchronous>, transform_indices = @transform_2, window_bounds = array<i64: 8, 32>}, {pipeline_mode = #tpu.pipeline_mode<synchronous>, transform_indices = @transform_3, window_bounds = array<i64: 1, 32>}, {pipeline_mode = #tpu.pipeline_mode<synchronous>, transform_indices = @transform_4, window_bounds = array<i64: 1, 32>}, {transform_indices = @transform_5, window_bounds = array<i64: 16, 32>}]} {
    %c0 = arith.constant 0 : index
    %c0_0 = arith.constant 0 : index
    %0 = vector.load %arg1[%c0, %c0_0] : memref<16x8xf32, #tpu.memory_space<vmem>>, vector<16x8xf32>
    %c0_1 = arith.constant 0 : index
    %c0_2 = arith.constant 0 : index
    %1 = vector.load %arg2[%c0_1, %c0_2] : memref<8x32xf32, #tpu.memory_space<vmem>>, vector<8x32xf32>
    %cst = arith.constant dense<0.000000e+00> : vector<16x32xf32>
    %2 = tpu.matmul %0, %1, %cst {dimension_numbers = #tpu.dot_dimension_numbers<[1], [0], [0], [1], [0, 0, 1, 1], [], []>} : vector<16x8xf32>, vector<8x32xf32>, vector<16x32xf32> -> vector<16x32xf32>
    %3 = vector.shape_cast %2 : vector<16x32xf32> to vector<2x8x32xf32>
    %c0_3 = arith.constant 0 : index
    %c0_4 = arith.constant 0 : index
    %4 = vector.load %arg3[%c0_3, %c0_4] : memref<8x32xf32, #tpu.memory_space<vmem>>, vector<8x32xf32>
    %5 = vector.shape_cast %4 : vector<8x32xf32> to vector<1x8x32xf32>
    %6 = vector.broadcast %5 : vector<1x8x32xf32> to vector<2x8x32xf32>
    %7 = arith.addf %3, %6 : vector<2x8x32xf32>
    %8 = vector.shape_cast %7 : vector<2x8x32xf32> to vector<16x32xf32>
    %cst_5 = arith.constant dense<0.000000e+00> : vector<16xf32>
    %9 = vector.multi_reduction <add>, %8, %cst_5 [1] : vector<16x32xf32> to vector<16xf32>
    %10 = vector.shape_cast %9 : vector<16xf32> to vector<16x1xf32>
    %cst_6 = arith.constant 3.200000e+01 : f32
    %11 = vector.broadcast %cst_6 : f32 to vector<16x1xf32>
    %12 = arith.divf %10, %11 : vector<16x1xf32>
    %13 = arith.mulf %8, %8 : vector<16x32xf32>
    %cst_7 = arith.constant dense<0.000000e+00> : vector<16xf32>
    %14 = vector.multi_reduction <add>, %13, %cst_7 [1] : vector<16x32xf32> to vector<16xf32>
    %15 = vector.shape_cast %14 : vector<16xf32> to vector<16x1xf32>
    %cst_8 = arith.constant 3.200000e+01 : f32
    %16 = vector.broadcast %cst_8 : f32 to vector<16x1xf32>
    %17 = arith.divf %15, %16 : vector<16x1xf32>
    %18 = arith.mulf %12, %12 : vector<16x1xf32>
    %19 = arith.subf %17, %18 : vector<16x1xf32>
    %20 = vector.broadcast %12 : vector<16x1xf32> to vector<16x32xf32>
    %21 = arith.subf %8, %20 : vector<16x32xf32>
    %cst_9 = arith.constant 9.99999974E-6 : f32
    %22 = vector.broadcast %cst_9 : f32 to vector<16x1xf32>
    %23 = arith.addf %19, %22 : vector<16x1xf32>
    %24 = math.rsqrt %23 : vector<16x1xf32>
    %25 = vector.broadcast %24 : vector<16x1xf32> to vector<16x32xf32>
    %26 = arith.mulf %21, %25 : vector<16x32xf32>
    %c0_10 = arith.constant 0 : index
    %c0_11 = arith.constant 0 : index
    %27 = vector.load %arg4[%c0_10, %c0_11] : memref<1x32xf32, #tpu.memory_space<vmem>>, vector<1x32xf32>
    %28 = vector.broadcast %27 : vector<1x32xf32> to vector<16x32xf32>
    %29 = arith.mulf %26, %28 : vector<16x32xf32>
    %c0_12 = arith.constant 0 : index
    %c0_13 = arith.constant 0 : index
    %30 = vector.load %arg5[%c0_12, %c0_13] : memref<1x32xf32, #tpu.memory_space<vmem>>, vector<1x32xf32>
    %31 = vector.broadcast %30 : vector<1x32xf32> to vector<16x32xf32>
    %32 = arith.addf %29, %31 : vector<16x32xf32>
    %c0_14 = arith.constant 0 : index
    %c0_15 = arith.constant 0 : index
    %33 = vector.load %arg6[%c0_14, %c0_15] : memref<16x32xf32, #tpu.memory_space<vmem>>, vector<16x32xf32>
    tpu.vector_store %arg6[%c0_14, %c0_15], %32 {strides = array<i32>} : memref<16x32xf32, #tpu.memory_space<vmem>>, vector<16x32xf32>,
    return
  }
  func.func @transform_0(%arg0: i32) -> (i32, i32) {
    %c0_i32 = arith.constant 0 : i32
    %c0_i32_0 = arith.constant 0 : i32
    return %arg0, %c0_i32 : i32, i32
  }
  func.func @transform_1(%arg0: i32) -> (i32, i32) {
    %c0_i32 = arith.constant 0 : i32
    %c0_i32_0 = arith.constant 0 : i32
    %c0_i32_1 = arith.constant 0 : i32
    return %c0_i32, %c0_i32_0 : i32, i32
  }
  func.func @transform_2(%arg0: i32) -> (i32, i32) {
    %c0_i32 = arith.constant 0 : i32
    %c0_i32_0 = arith.constant 0 : i32
    %c0_i32_1 = arith.constant 0 : i32
    return %c0_i32, %c0_i32_0 : i32, i32
  }
  func.func @transform_3(%arg0: i32) -> (i32, i32) {
    %c0_i32 = arith.constant 0 : i32
    %c0_i32_0 = arith.constant 0 : i32
    %c0_i32_1 = arith.constant 0 : i32
    return %c0_i32, %c0_i32_0 : i32, i32
  }
  func.func @transform_4(%arg0: i32) -> (i32, i32) {
    %c0_i32 = arith.constant 0 : i32
    %c0_i32_0 = arith.constant 0 : i32
    %c0_i32_1 = arith.constant 0 : i32
    return %c0_i32, %c0_i32_0 : i32, i32
  }
  func.func @transform_5(%arg0: i32) -> (i32, i32) {
    %c0_i32 = arith.constant 0 : i32
    %c0_i32_0 = arith.constant 0 : i32
    return %arg0, %c0_i32 : i32, i32
  }
}

</mosaic_0001>

<llo_original>
// kernel: dygraphformer_forward.1
$region0: #{dygraphformer_forward.1}
  #allocation0 [shape = 'u32[]', space=smem, size = 0x4, offset = 0x4, fixed_abs, tag = 'smem constant byte address 0x4 - core index']
  #allocation1 [shape = 'u32[144,128]{1,0:T(1,128)}', space=vmem, size = 0x12000, scoped, tag = 'internal scratch']
  %s0 = inlined_call_operand.hbm [shape: f32[16,8], index: 0, kind: input, shape index: {}]
  %s1 = inlined_call_operand.hbm [shape: f32[8,32], index: 1, kind: input, shape index: {}]
  %s2 = inlined_call_operand.hbm [shape: f32[8,32], index: 2, kind: input, shape index: {}]
  %s3 = inlined_call_operand.hbm [shape: f32[1,32], index: 3, kind: input, shape index: {}]
  %s4 = inlined_call_operand.hbm [shape: f32[1,32], index: 4, kind: input, shape index: {}]
  %s5 = inlined_call_operand.hbm [shape: f32[16,32], index: 5, kind: output, shape index: {}]
  %s6 = sld [smem:[#allocation0]]
  $region50: #{dygraphformer_forward.1} parent=0
    _
  %s8 = ssub.s32 1, %s6
  %s9 = scalar_select 0, %s8, %s6
  $region1: #{dygraphformer_forward.1} parent=0
    #allocation2 [shape = 'u8[8192]{0}', space=vmem, size = 0x2000, scoped, tag = 'input window, operand 0, single buffered']
    #allocation3 [shape = 's32[1]{0}', space=sflag, size = 0x4, scoped, tag = 'scoped memory for dygraphformer_forward.1']
    #allocation4 [shape = 's32[1]{0}', space=sflag, size = 0x4, scoped, tag = 'scoped memory for dygraphformer_forward.1']
    #allocation5 [shape = 'u8[4096]{0}', space=vmem, size = 0x1000, scoped, tag = 'input window, operand 1, single buffered']
    #allocation6 [shape = 's32[1]{0}', space=sflag, size = 0x4, scoped, tag = 'scoped memory for dygraphformer_forward.1']
    #allocation7 [shape = 'u8[4096]{0}', space=vmem, size = 0x1000, scoped, tag = 'input window, operand 2, single buffered']
    #allocation8 [shape = 'u8[512]{0}', space=vmem, size = 0x400, scoped, tag = 'input window, operand 3, single buffered']
    #allocation9 [shape = 's32[1]{0}', space=sflag, size = 0x4, scoped, tag = 'scoped memory for dygraphformer_forward.1']
    #allocation10 [shape = 'u8[512]{0}', space=vmem, size = 0x400, scoped, tag = 'input window, operand 4, single buffered']
    #allocation11 [shape = 'u8[8192]{0}', space=vmem, size = 0x2000, scoped, tag = 'output window, operand 0, single buffered']
    %10 = vsyncpa [#allocation3], 0
    %11 = vsyncpa [#allocation6], 0
    %12 = vsyncpa [#allocation9], 0
    %13 = vsyncpa [#allocation4], 0
    // Predicated region
    $region2: #{dygraphformer_forward.1} parent=1 // pred_check
      _
    $region3: #{dygraphformer_forward.1} parent=1 // pred_check_branch
      %15 = sbr.rel (0) target = $region5
    $region4: #{dygraphformer_forward.1} parent=1 // pred_region
      %s17 = ssub.s32 256, 256
      %18 = vsyncadd [#allocation3], %s17
      %s19 = sshll.u32 [#allocation2], 4
      %s20 = int_to_ptr.vmem [resolvable:$true] %s19
      %25 = dma.hbm_to_vmem [thread:$0]  %s0, 256, %s20, [#allocation3], 128, 128, 8
    $region5: #{dygraphformer_forward.1} parent=1 // pred_fallthru
      _
    // Predicated region
    $region6: #{dygraphformer_forward.1} parent=1 // pred_check
      _
    $region7: #{dygraphformer_forward.1} parent=1 // pred_check_branch
      %27 = sbr.rel (0) target = $region9
    $region8: #{dygraphformer_forward.1} parent=1 // pred_region
      %s29 = ssub.s32 128, 128
      %30 = vsyncadd [#allocation6], %s29
      %s32 = sshll.u32 [#allocation5], 4
      %s33 = int_to_ptr.vmem [resolvable:$true] %s32
      %35 = dma.hbm_to_vmem [thread:$0]  %s1, 128, %s33, [#allocation6]
    $region9: #{dygraphformer_forward.1} parent=1 // pred_fallthru
      _
    // Predicated region
    $region10: #{dygraphformer_forward.1} parent=1 // pred_check
      _
    $region11: #{dygraphformer_forward.1} parent=1 // pred_check_branch
      %37 = sbr.rel (0) target = $region13
    $region12: #{dygraphformer_forward.1} parent=1 // pred_region
      %s39 = ssub.s32 128, 128
      %40 = vsyncadd [#allocation6], %s39
      %s42 = sshll.u32 [#allocation7], 4
      %s43 = int_to_ptr.vmem [resolvable:$true] %s42
      %45 = dma.hbm_to_vmem [thread:$0]  %s2, 128, %s43, [#allocation6]
    $region13: #{dygraphformer_forward.1} parent=1 // pred_fallthru
      _
    // Predicated region
    $region14: #{dygraphformer_forward.1} parent=1 // pred_check
      _
    $region15: #{dygraphformer_forward.1} parent=1 // pred_check_branch
      %47 = sbr.rel (0) target = $region17
    $region16: #{dygraphformer_forward.1} parent=1 // pred_region
      %s49 = ssub.s32 16, 16
      %50 = vsyncadd [#allocation9], %s49
      %s52 = sshll.u32 [#allocation8], 4
      %s53 = int_to_ptr.vmem [resolvable:$true] %s52
      %55 = dma.hbm_to_vmem [thread:$0]  %s3, 16, %s53, [#allocation9]
    $region17: #{dygraphformer_forward.1} parent=1 // pred_fallthru
      _
    // Predicated region
    $region18: #{dygraphformer_forward.1} parent=1 // pred_check
      _
    $region19: #{dygraphformer_forward.1} parent=1 // pred_check_branch
      %57 = sbr.rel (0) target = $region21
    $region20: #{dygraphformer_forward.1} parent=1 // pred_region
      %s59 = ssub.s32 16, 16
      %60 = vsyncadd [#allocation9], %s59
      %s62 = sshll.u32 [#allocation10], 4
      %s63 = int_to_ptr.vmem [resolvable:$true] %s62
      %65 = dma.hbm_to_vmem [thread:$0]  %s4, 16, %s63, [#allocation9]
    $region21: #{dygraphformer_forward.1} parent=1 // pred_fallthru
      _
    // Predicated region
    $region22: #{dygraphformer_forward.1} parent=1 // pred_check
      _
    $region23: #{dygraphformer_forward.1} parent=1 // pred_check_branch
      %67 = sbr.rel (0) target = $region25
    $region24: #{dygraphformer_forward.1} parent=1 // pred_region
      %68 = dma.done [#allocation3], 256
    $region25: #{dygraphformer_forward.1} parent=1 // pred_fallthru
      _
    // Predicated region
    $region26: #{dygraphformer_forward.1} parent=1 // pred_check
      _
    $region27: #{dygraphformer_forward.1} parent=1 // pred_check_branch
      %70 = sbr.rel (0) target = $region29
    $region28: #{dygraphformer_forward.1} parent=1 // pred_region
      %71 = dma.done [#allocation6], 128
    $region29: #{dygraphformer_forward.1} parent=1 // pred_fallthru
      _
    // Predicated region
    $region30: #{dygraphformer_forward.1} parent=1 // pred_check
      _
    $region31: #{dygraphformer_forward.1} parent=1 // pred_check_branch
      %73 = sbr.rel (0) target = $region33
    $region32: #{dygraphformer_forward.1} parent=1 // pred_region
      %74 = dma.done [#allocation6], 128
    $region33: #{dygraphformer_forward.1} parent=1 // pred_fallthru
      _
    // Predicated region
    $region34: #{dygraphformer_forward.1} parent=1 // pred_check
      _
    $region35: #{dygraphformer_forward.1} parent=1 // pred_check_branch
      %76 = sbr.rel (0) target = $region37
    $region36: #{dygraphformer_forward.1} parent=1 // pred_region
      %77 = dma.done [#allocation9], 16
    $region37: #{dygraphformer_forward.1} parent=1 // pred_fallthru
      _
    // Predicated region
    $region38: #{dygraphformer_forward.1} parent=1 // pred_check
      _
    $region39: #{dygraphformer_forward.1} parent=1 // pred_check_branch
      %79 = sbr.rel (0) target = $region41
    $region40: #{dygraphformer_forward.1} parent=1 // pred_region
      %80 = dma.done [#allocation9], 16
    $region41: #{dygraphformer_forward.1} parent=1 // pred_fallthru
      _
    %v81 = vld [vmem:[#allocation2] sm:$0xff]
    %v82 = vld [vmem:[#allocation2 + $0x8] sm:$0xff]
    %v83 = vld [vmem:[#allocation5] sm:$0xff]
    %vm84 = vcmask 64512
    %v86 = vsel %vm84, %v81, 0
    %v89 = vsel %vm84, %v82, 0
    %91 = vmatprep.subr.mxu0 0.0
    %92 = vmatpush1.msra.mxu0 %v83
    %93 = vmatprep.subr.mxu0 0.0
    %94 = vmatpush1.msra.mxu0 0.0
    %95 = vmatprep.subr.mxu0 0.0
    %96 = vmatpush1.msra.mxu0 0.0
    %97 = vmatprep.subr.mxu0 0.0
    %98 = vmatpush1.msra.mxu0 0.0
    %99 = vmatprep.subr.mxu0 0.0
    %100 = vmatpush1.msra.mxu0 0.0
    %101 = vmatprep.subr.mxu0 0.0
    %102 = vmatpush1.msra.mxu0 0.0
    %103 = vmatprep.subr.mxu0 0.0
    %104 = vmatpush1.msra.mxu0 0.0
    %105 = vmatprep.subr.mxu0 0.0
    %106 = vmatpush1.msra.mxu0 0.0
    %107 = vmatprep.subr.mxu0 0.0
    %108 = vmatpush1.msra.mxu0 0.0
    %109 = vmatprep.subr.mxu0 0.0
    %110 = vmatpush1.msra.mxu0 0.0
    %111 = vmatprep.subr.mxu0 0.0
    %112 = vmatpush1.msra.mxu0 0.0
    %113 = vmatprep.subr.mxu0 0.0
    %114 = vmatpush1.msra.mxu0 0.0
    %115 = vmatprep.subr.mxu0 0.0
    %116 = vmatpush1.msra.mxu0 0.0
    %117 = vmatprep.subr.mxu0 0.0
    %118 = vmatpush1.msra.mxu0 0.0
    %119 = vmatprep.subr.mxu0 0.0
    %120 = vmatpush1.msra.mxu0 0.0
    %121 = vmatprep.subr.mxu0 0.0
    %122 = vmatpush1.msra.mxu0 0.0
    %123 = vmatprep.subr.mxu0 0.0
    %124 = vmatpush1.msra.mxu0 0.0
    %125 = vmatprep.subr.mxu0 0.0
    %126 = vmatpush1.msra.mxu0 0.0
    %127 = vmatprep.subr.mxu0 0.0
    %128 = vmatpush1.msra.mxu0 0.0
    %129 = vmatprep.subr.mxu0 0.0
    %130 = vmatpush1.msra.mxu0 0.0
    %131 = vmatprep.subr.mxu0 0.0
    %132 = vmatpush1.msra.mxu0 0.0
    %133 = vmatprep.subr.mxu0 0.0
    %134 = vmatpush1.msra.mxu0 0.0
    %135 = vmatprep.subr.mxu0 0.0
    %136 = vmatpush1.msra.mxu0 0.0
    %137 = vmatprep.subr.mxu0 0.0
    %138 = vmatpush1.msra.mxu0 0.0
    %139 = vmatprep.subr.mxu0 0.0
    %140 = vmatpush1.msra.mxu0 0.0
    %141 = vmatprep.subr.mxu0 0.0
    %142 = vmatpush1.msra.mxu0 0.0
    %143 = vmatprep.subr.mxu0 0.0
    %144 = vmatpush1.msra.mxu0 0.0
    %145 = vmatprep.subr.mxu0 0.0
    %146 = vmatpush1.msra.mxu0 0.0
    %147 = vmatprep.subr.mxu0 0.0
    %148 = vmatpush1.msra.mxu0 0.0
    %149 = vmatprep.subr.mxu0 0.0
    %150 = vmatpush1.msra.mxu0 0.0
    %151 = vmatprep.subr.mxu0 0.0
    %152 = vmatpush1.msra.mxu0 0.0
    %153 = vmatprep.subr.mxu0 0.0
    %154 = vmatpush1.msra.mxu0 0.0
    %155 = vmatprep.mubr.f32.mxu0 0.0
    %156 = vmatmul.mubr.f32.gmra.mrb[0].mxu0 %v86
    %v157 = vpop.f32.mrb[0].mxu0
    %v158 = vadd.f32 0.0, %v157
    %v159 = vpop.f32.mrb[0].mxu0
    %160 = vmatprep.mubr.f32.mxu0 0.0
    %161 = vmatmul.mubr.f32.gmra.mrb[0].mxu0 %v89
    %v162 = vpop.f32.mrb[0].mxu0
    %v163 = vadd.f32 0.0, %v162
    %v164 = vpop.f32.mrb[0].mxu0
    %165 = vdwg.mxu0
    %v166 = vld [vmem:[#allocation7] sm:$0xff]
    %v167 = vadd.f32 %v158, %v166
    %v168 = vadd.f32 %v163, %v166
    %vm169 = vcmask 261120
    %v170 = vsel %vm169, %v167, 0.0
    %171 = vadd.xlane.f32.xlu0 %v170
    %v172 = vpop.xlane.xlu0 %171
    %v173 = vsel %vm169, %v168, 0.0
    %174 = vadd.xlane.f32.xlu0 %v173
    %v175 = vpop.xlane.xlu0 %174
    %v176 = vrcp.pop 32.0
    %v177 = vmul.f32 %v172, %v176
    %v178 = vmul.f32 %v175, %v176
    %v179 = vmul.f32 %v167, %v167
    %v180 = vmul.f32 %v168, %v168
    %v181 = vsel %vm169, %v179, 0.0
    %182 = vadd.xlane.f32.xlu0 %v181
    %v183 = vpop.xlane.xlu0 %182
    %v184 = vsel %vm169, %v180, 0.0
    %185 = vadd.xlane.f32.xlu0 %v184
    %v186 = vpop.xlane.xlu0 %185
    %v187 = vmul.f32 %v183, %v176
    %v188 = vmul.f32 %v186, %v176
    %v189 = vmul.f32 %v177, %v177
    %v190 = vmul.f32 %v178, %v178
    %v191 = vsub.f32 %v187, %v189
    %v192 = vsub.f32 %v188, %v190
    %v193 = vsub.f32 %v167, %v177
    %v194 = vsub.f32 %v168, %v178
    %v195 = vadd.f32 %v191, 1e-05
    %v196 = vadd.f32 %v192, 1e-05
    %v197 = vrsqrt.pop %v195
    %v198 = vrsqrt.pop %v196
    %v199 = vmul.f32 %v193, %v197
    %v200 = vmul.f32 %v194, %v198
    %v201 = vld [vmem:[#allocation8] sm:$0x1]
    %v203 = vlaneseq
    %v204 = vshrl.u32 %v203, 7
    %v205 = vsub.s32 0, %v204
    %v206 = vrot.slane %v201, %v205
    %v208 = vmul.f32 %v199, %v206
    %v209 = vmul.f32 %v200, %v206
    %v210 = vld [vmem:[#allocation10] sm:$0x1]
    %v212 = vlaneseq
    %v213 = vshrl.u32 %v212, 7
    %v214 = vsub.s32 0, %v213
    %v215 = vrot.slane %v210, %v214
    %v217 = vadd.f32 %v208, %v215
    %v218 = vadd.f32 %v209, %v215
    %219 = vst.msk [vmem:[#allocation11] sm:$0xff] %vm169, %v217
    %220 = vst.msk [vmem:[#allocation11 + $0x8] sm:$0xff] %vm169, %v218
    // Predicated region
    $region42: #{dygraphformer_forward.1} parent=1 // pred_check
      _
    $region43: #{dygraphformer_forward.1} parent=1 // pred_check_branch
      %222 = sbr.rel (0) target = $region45
    $region44: #{dygraphformer_forward.1} parent=1 // pred_region
      %s224 = ssub.s32 256, 256
      %225 = vsyncadd [#allocation4], %s224
      %s226 = sshll.u32 [#allocation11], 4
      %s227 = int_to_ptr.vmem [resolvable:$true] %s226
      %232 = dma.vmem_to_hbm [thread:$0]  %s227, 256, %s5, [#allocation4], 128, 128, 8
    $region45: #{dygraphformer_forward.1} parent=1 // pred_fallthru
      _
    // Predicated region
    $region46: #{dygraphformer_forward.1} parent=1 // pred_check
      _
    $region47: #{dygraphformer_forward.1} parent=1 // pred_check_branch
      %234 = sbr.rel (0) target = $region49
    $region48: #{dygraphformer_forward.1} parent=1 // pred_region
      %235 = dma.done [#allocation4], 256
    $region49: #{dygraphformer_forward.1} parent=1 // pred_fallthru
      _
    %236 = vsyncpa [#allocation3], 1
    %237 = vsyncpa [#allocation6], 1
    %238 = vsyncpa [#allocation9], 1
    %239 = vsyncpa [#allocation4], 1

</llo_original>
